<compile_context>
chip_gen: v6e
topology: v6e:2x2x1
jax: 0.10.0
libtpu: 0.0.40
codegen_flags: <defaults>
</compile_context>

<pallas_src>
import jax
import jax.numpy as jnp
from jax.experimental import pallas as pl
from jax.experimental.pallas import tpu as pltpu

_MiB = 1024 * 1024
# v5e/v6e have 128 MiB physical VMEM, v7x only 64 MiB (default scoped 16/32
# MiB). 40 MiB working-set budget + 56 MiB scoped cap is safe on every gen.
_VMEM_BUDGET = 40 * _MiB
_VMEM_CAP = 56 * _MiB


def _round_up(v, m):
    return (v + m - 1) // m * m


def _pick_tile(total, preferred):
    """Largest MXU-friendly tile (multiple of 128, ideally 256+) dividing total."""
    for t in (preferred, 512, 384, 256, 128):
        if t <= total and total % t == 0:
            return t
    return total


# ---------------------------------------------------------------------------
# Kernels
# ---------------------------------------------------------------------------
def _adaptive_residual_kernel(x_ref, wt_ref, b_ref, alpha_ref, o_ref):
    """Fused  o = x @ wt + b + alpha * x  with the whole weight VMEM-resident.

    wt is the pre-transposed PyTorch weight (in, out): plain jnp.dot, no
    in-kernel transpose.  The matmul runs in wt's dtype (f32 or bf16, MXU);
    the epilogue stays f32 on the VPU; only the final store casts.
    """
    x = x_ref[...]                                              # (tm, Dp) f32
    y = jnp.dot(x.astype(wt_ref.dtype), wt_ref[...],
                preferred_element_type=jnp.float32)             # (tm, Dp) f32
    alpha = alpha_ref[0]                                        # scalar (SMEM)
    o_ref[...] = (y + b_ref[...] + alpha * x).astype(o_ref.dtype)


def _adaptive_residual_tiled_kernel(x_ref, wt_ref, b_ref, xres_ref, alpha_ref,
                                    o_ref, acc_ref):
    """K/N-tiled variant for weights too large to keep resident in VMEM."""
    k = pl.program_id(2)

    @pl.when(k == 0)
    def _init():
        acc_ref[...] = jnp.zeros_like(acc_ref)

    acc_ref[...] += jnp.dot(x_ref[...].astype(wt_ref.dtype), wt_ref[...],
                            preferred_element_type=jnp.float32)

    @pl.when(k == pl.num_programs(2) - 1)
    def _finalize():
        o_ref[...] = (acc_ref[...] + b_ref[...]
                      + alpha_ref[0] * xres_ref[...]).astype(o_ref.dtype)


# ---------------------------------------------------------------------------
# Wrapper
# ---------------------------------------------------------------------------
def adaptive_residual_layer(x, w, b, alpha, *, matmul_dtype=None,
                            block_rows=None, tile_n=None, tile_k=None,
                            tiling="auto"):
    """Forward of AdaptiveResidualLayer:  x @ w.T + b + alpha * x.

    x: (..., D); w: (D, D) PyTorch Linear weight (out, in); b: (D,); alpha: scalar.
    matmul_dtype: pass jnp.bfloat16 on v6e/v7x for the native-MXU fast path
    (epilogue stays f32). tiling: "auto" | "resident" | "tiled".
    """
    *lead, D = x.shape
    assert w.shape == (D, D) and b.shape == (D,)
    out_dtype = x.dtype

    x2 = x.reshape(-1, D).astype(jnp.float32)
    N = x2.shape[0]
    mm_dtype = jnp.dtype(matmul_dtype) if matmul_dtype is not None else jnp.dtype(jnp.float32)
    w_itemsize = mm_dtype.itemsize

    # -- lane-dense padding of the feature dim (multiple of 128) -------------
    Dp = _round_up(max(D, 128), 128)
    wt = jnp.asarray(w, jnp.float32).T          # one-time XLA transpose: (in, out)
    b1 = jnp.asarray(b, jnp.float32)
    if Dp != D:
        x2 = jnp.pad(x2, ((0, 0), (0, Dp - D)))
        wt = jnp.pad(wt, ((0, Dp - D), (0, Dp - D)))
        b1 = jnp.pad(b1, (0, Dp - D))
    wt = wt.astype(mm_dtype)
    b2 = b1.reshape(1, Dp)
    alpha1 = jnp.reshape(alpha, (1,)).astype(jnp.float32)

    # -- VMEM accounting ------------------------------------------------------
    def resident_bytes(tm):
        # x + out tiles double-buffered (f32); weight + bias single-buffered.
        return 2 * (tm * Dp * 4 + tm * Dp * 4) + Dp * Dp * w_itemsize + 2 * Dp * 4

    if block_rows is None:
        if N <= 256:
            block_rows = N                     # whole problem in one step
        else:
            block_rows = min(512, _round_up(N, 8))   # mem-bound sweet spot
        while block_rows > 128 and resident_bytes(block_rows) > _VMEM_BUDGET:
            block_rows //= 2
    block_rows = min(block_rows, N) if N <= 256 else block_rows

    use_tiled = (tiling == "tiled") or (
        tiling == "auto" and resident_bytes(block_rows) > _VMEM_BUDGET)

    flops = 2 * N * Dp * Dp + 3 * N * Dp
    bytes_accessed = N * Dp * 4 + Dp * Dp * w_itemsize + Dp * 4 + 4 + N * Dp * 4

    def _finish(out_padded):
        out = out_padded[:, :D] if Dp != D else out_padded
        return out.reshape(*lead, D)

    if not use_tiled:
        grid_rows = pl.cdiv(N, block_rows)
        vmem_limit = int(min(resident_bytes(block_rows) * 1.25 + 2 * _MiB, _VMEM_CAP))

        def build(single_buffer):
            def inv_spec(shape):
                if single_buffer:
                    # grid-invariant block: double-buffering only wastes VMEM
                    return pl.BlockSpec(shape, lambda i: (0, 0),
                                        pipeline_mode=pl.Buffered(1))
                return pl.BlockSpec(shape, lambda i: (0, 0))

            return pl.pallas_call(
                _adaptive_residual_kernel,
                out_shape=jax.ShapeDtypeStruct((N, Dp), out_dtype),
                grid=(grid_rows,),
                in_specs=[
                    pl.BlockSpec((block_rows, Dp), lambda i: (i, 0)),      # x rows
                    inv_spec((Dp, Dp)),                                    # weight
                    inv_spec((1, Dp)),                                     # bias
                    pl.BlockSpec(memory_space=pltpu.MemorySpace.SMEM),     # alpha
                ],
                out_specs=pl.BlockSpec((block_rows, Dp), lambda i: (i, 0)),
                compiler_params=pltpu.CompilerParams(
                    dimension_semantics=("parallel",),
                    vmem_limit_bytes=vmem_limit),
                cost_estimate=pl.CostEstimate(
                    flops=flops, transcendentals=0, bytes_accessed=bytes_accessed),
            )

        args = (x2, wt, b2, alpha1)
        try:
            out = build(True)(*args)
        except Exception:
            # Fallback for jax versions without BlockSpec pipeline_mode /
            # Buffered(1): identical kernel, default (double) buffering.
            out = build(False)(*args)
        return _finish(out)

    # ---------------------- K/N-tiled large-D path --------------------------
    tn = tile_n if tile_n is not None else _pick_tile(Dp, 512)
    tk = tile_k if tile_k is not None else _pick_tile(Dp, 512)
    assert Dp % tn == 0 and Dp % tk == 0 and tn % 128 == 0 and tk % 128 == 0
    tm = min(block_rows, 256)

    tiled_need = (2 * (tm * tk * 4 + tk * tn * w_itemsize + tn * 4
                       + tm * tn * 4 + tm * tn * 4) + tm * tn * 4)
    vmem_limit = int(min(tiled_need * 1.25 + 2 * _MiB, _VMEM_CAP))

    call = pl.pallas_call(
        _adaptive_residual_tiled_kernel,
        out_shape=jax.ShapeDtypeStruct((N, Dp), out_dtype),
        grid=(pl.cdiv(N, tm), Dp // tn, Dp // tk),
        in_specs=[
            pl.BlockSpec((tm, tk), lambda i, j, k: (i, k)),      # x (matmul)
            pl.BlockSpec((tk, tn), lambda i, j, k: (k, j)),      # weight tile
            pl.BlockSpec((1, tn), lambda i, j, k: (0, j)),       # bias tile
            pl.BlockSpec((tm, tn), lambda i, j, k: (i, j)),      # x (residual)
            pl.BlockSpec(memory_space=pltpu.MemorySpace.SMEM),   # alpha
        ],
        out_specs=pl.BlockSpec((tm, tn), lambda i, j, k: (i, j)),
        scratch_shapes=[pltpu.VMEM((tm, tn), jnp.float32)],
        compiler_params=pltpu.CompilerParams(
            dimension_semantics=("parallel", "parallel", "arbitrary"),
            vmem_limit_bytes=vmem_limit),
        cost_estimate=pl.CostEstimate(
            flops=flops, transcendentals=0, bytes_accessed=bytes_accessed),
    )
    return _finish(call(x2, wt, b2, x2, alpha1))


def _reference(x, w, b, alpha):
    """Pure-JAX transcription of the PyTorch forward."""
    return x @ w.T + b + alpha * x


if __name__ == "__main__":
    input_dim = 32
    n_rows = 8

    key = jax.random.PRNGKey(0)
    kx, kw, kb = jax.random.split(key, 3)

    # torch.nn.Linear default init: U(-1/sqrt(fan_in), 1/sqrt(fan_in))
    bound = 1.0 / (input_dim ** 0.5)
    x = jax.random.normal(kx, (n_rows, input_dim), dtype=jnp.float32)
    w = jax.random.uniform(kw, (input_dim, input_dim), jnp.float32, -bound, bound)
    b = jax.random.uniform(kb, (input_dim,), jnp.float32, -bound, bound)
    alpha = jnp.float32(0.6)            # module init: nn.Parameter(torch.tensor(0.6))

    ref = _reference(x, w, b, alpha)

    # 1) default f32 resident-weight path (lane-padded to 128)
    out = jax.block_until_ready(adaptive_residual_layer(x, w, b, alpha))
    assert out.shape == (n_rows, input_dim)
    assert jnp.allclose(out, ref, atol=1e-5, rtol=1e-5), "f32 path mismatch"

    # 2) bf16-matmul fast path (v6e/v7x MXU); epilogue stays f32
    out_bf = jax.block_until_ready(
        adaptive_residual_layer(x, w, b, alpha, matmul_dtype=jnp.bfloat16))
    assert jnp.allclose(out_bf, ref, atol=5e-2, rtol=5e-2), "bf16 path mismatch"

    # 3) K/N-tiled accumulator path (auto-selected for large D; forced here at
    #    small shapes just to validate it end to end)
    d2, n2 = 256, 64
    kx2, kw2, kb2 = jax.random.split(jax.random.PRNGKey(1), 3)
    bound2 = 1.0 / (d2 ** 0.5)
    x_big = jax.random.normal(kx2, (n2, d2), dtype=jnp.float32)
    w_big = jax.random.uniform(kw2, (d2, d2), jnp.float32, -bound2, bound2)
    b_big = jax.random.uniform(kb2, (d2,), jnp.float32, -bound2, bound2)
    out_t = jax.block_until_ready(
        adaptive_residual_layer(x_big, w_big, b_big, alpha,
                                tiling="tiled", tile_n=128, tile_k=128))
    ref_t = _reference(x_big, w_big, b_big, alpha)
    assert jnp.allclose(out_t, ref_t, atol=1e-4, rtol=1e-4), "tiled path mismatch"

    print("KERNEL_OK")
</pallas_src>

<mosaic_0001>
module attributes {stable_mosaic.version = 11 : i64} {
  func.func @_adaptive_residual_kernel(%arg0: i32, %arg1: memref<8x128xf32, #tpu.memory_space<vmem>>, %arg2: memref<128x128xf32, #tpu.memory_space<vmem>>, %arg3: memref<1x128xf32, #tpu.memory_space<vmem>>, %arg4: memref<1xf32, #tpu.memory_space<smem>>, %arg5: memref<8x128xf32, #tpu.memory_space<vmem>>) attributes {dimension_semantics = [#tpu.dimension_semantics<parallel>], iteration_bounds = array<i64: 1>, scalar_prefetch = 0 : i64, scratch_operands = 0 : i64, tpu.core_type = #tpu.core_type<tc>, window_params = [{transform_indices = @transform_0, window_bounds = array<i64: 8, 128>}, {pipeline_mode = #tpu.pipeline_mode<synchronous>, transform_indices = @transform_1, window_bounds = array<i64: 128, 128>}, {pipeline_mode = #tpu.pipeline_mode<synchronous>, transform_indices = @transform_2, window_bounds = array<i64: 1, 128>}, {transform_indices = @transform_3, window_bounds = array<i64: 1>}, {transform_indices = @transform_4, window_bounds = array<i64: 8, 128>}]} {
    %c0 = arith.constant 0 : index
    %c0_0 = arith.constant 0 : index
    %0 = vector.load %arg1[%c0, %c0_0] : memref<8x128xf32, #tpu.memory_space<vmem>>, vector<8x128xf32>
    %c0_1 = arith.constant 0 : index
    %c0_2 = arith.constant 0 : index
    %1 = vector.load %arg2[%c0_1, %c0_2] : memref<128x128xf32, #tpu.memory_space<vmem>>, vector<128x128xf32>
    %cst = arith.constant dense<0.000000e+00> : vector<8x128xf32>
    %2 = tpu.matmul %0, %1, %cst {dimension_numbers = #tpu.dot_dimension_numbers<[1], [0], [0], [1], [0, 0, 1, 1], [], []>} : vector<8x128xf32>, vector<128x128xf32>, vector<8x128xf32> -> vector<8x128xf32>
    %c0_3 = arith.constant 0 : index
    %3 = memref.load %arg4[%c0_3] : memref<1xf32, #tpu.memory_space<smem>>
    %c0_4 = arith.constant 0 : index
    %c0_5 = arith.constant 0 : index
    %4 = vector.load %arg3[%c0_4, %c0_5] : memref<1x128xf32, #tpu.memory_space<vmem>>, vector<1x128xf32>
    %5 = vector.broadcast %4 : vector<1x128xf32> to vector<8x128xf32>
    %6 = arith.addf %2, %5 : vector<8x128xf32>
    %7 = vector.broadcast %3 : f32 to vector<8x128xf32>
    %8 = arith.mulf %7, %0 : vector<8x128xf32>
    %9 = arith.addf %6, %8 : vector<8x128xf32>
    %c0_6 = arith.constant 0 : index
    %c0_7 = arith.constant 0 : index
    %10 = vector.load %arg5[%c0_6, %c0_7] : memref<8x128xf32, #tpu.memory_space<vmem>>, vector<8x128xf32>
    tpu.vector_store %arg5[%c0_6, %c0_7], %9 {strides = array<i32>} : memref<8x128xf32, #tpu.memory_space<vmem>>, vector<8x128xf32>,
    return
  }
  func.func @transform_0(%arg0: i32) -> (i32, i32) {
    %c0_i32 = arith.constant 0 : i32
    %c0_i32_0 = arith.constant 0 : i32
    return %arg0, %c0_i32 : i32, i32
  }
  func.func @transform_1(%arg0: i32) -> (i32, i32) {
    %c0_i32 = arith.constant 0 : i32
    %c0_i32_0 = arith.constant 0 : i32
    %c0_i32_1 = arith.constant 0 : i32
    return %c0_i32, %c0_i32_0 : i32, i32
  }
  func.func @transform_2(%arg0: i32) -> (i32, i32) {
    %c0_i32 = arith.constant 0 : i32
    %c0_i32_0 = arith.constant 0 : i32
    %c0_i32_1 = arith.constant 0 : i32
    return %c0_i32, %c0_i32_0 : i32, i32
  }
  func.func @transform_3(%arg0: i32) -> i32 {
    %c0_i32 = arith.constant 0 : i32
    %c0_i32_0 = arith.constant 0 : i32
    return %c0_i32 : i32
  }
  func.func @transform_4(%arg0: i32) -> (i32, i32) {
    %c0_i32 = arith.constant 0 : i32
    %c0_i32_0 = arith.constant 0 : i32
    return %arg0, %c0_i32 : i32, i32
  }
}

module attributes {stable_mosaic.version = 11 : i64} {
  func.func @_adaptive_residual_kernel(%arg0: i32, %arg1: memref<8x128xf32, #tpu.memory_space<vmem>>, %arg2: memref<128x128xf32, #tpu.memory_space<vmem>>, %arg3: memref<1x128xf32, #tpu.memory_space<vmem>>, %arg4: memref<1xf32, #tpu.memory_space<smem>>, %arg5: memref<8x128xf32, #tpu.memory_space<vmem>>) attributes {dimension_semantics = [#tpu.dimension_semantics<parallel>], iteration_bounds = array<i64: 1>, scalar_prefetch = 0 : i64, scratch_operands = 0 : i64, tpu.core_type = #tpu.core_type<tc>, window_params = [{transform_indices = @transform_0, window_bounds = array<i64: 8, 128>}, {pipeline_mode = #tpu.pipeline_mode<synchronous>, transform_indices = @transform_1, window_bounds = array<i64: 128, 128>}, {pipeline_mode = #tpu.pipeline_mode<synchronous>, transform_indices = @transform_2, window_bounds = array<i64: 1, 128>}, {transform_indices = @transform_3, window_bounds = array<i64: 1>}, {transform_indices = @transform_4, window_bounds = array<i64: 8, 128>}]} {
    %c0 = arith.constant 0 : index
    %c0_0 = arith.constant 0 : index
    %0 = vector.load %arg1[%c0, %c0_0] : memref<8x128xf32, #tpu.memory_space<vmem>>, vector<8x128xf32>
    %c0_1 = arith.constant 0 : index
    %c0_2 = arith.constant 0 : index
    %1 = vector.load %arg2[%c0_1, %c0_2] : memref<128x128xf32, #tpu.memory_space<vmem>>, vector<128x128xf32>
    %cst = arith.constant dense<0.000000e+00> : vector<8x128xf32>
    %2 = tpu.matmul %0, %1, %cst {dimension_numbers = #tpu.dot_dimension_numbers<[1], [0], [0], [1], [0, 0, 1, 1], [], []>} : vector<8x128xf32>, vector<128x128xf32>, vector<8x128xf32> -> vector<8x128xf32>
    %c0_3 = arith.constant 0 : index
    %3 = memref.load %arg4[%c0_3] : memref<1xf32, #tpu.memory_space<smem>>
    %c0_4 = arith.constant 0 : index
    %c0_5 = arith.constant 0 : index
    %4 = vector.load %arg3[%c0_4, %c0_5] : memref<1x128xf32, #tpu.memory_space<vmem>>, vector<1x128xf32>
    %5 = vector.broadcast %4 : vector<1x128xf32> to vector<8x128xf32>
    %6 = arith.addf %2, %5 : vector<8x128xf32>
    %7 = vector.broadcast %3 : f32 to vector<8x128xf32>
    %8 = arith.mulf %7, %0 : vector<8x128xf32>
    %9 = arith.addf %6, %8 : vector<8x128xf32>
    %c0_6 = arith.constant 0 : index
    %c0_7 = arith.constant 0 : index
    %10 = vector.load %arg5[%c0_6, %c0_7] : memref<8x128xf32, #tpu.memory_space<vmem>>, vector<8x128xf32>
    tpu.vector_store %arg5[%c0_6, %c0_7], %9 {strides = array<i32>} : memref<8x128xf32, #tpu.memory_space<vmem>>, vector<8x128xf32>,
    return
  }
  func.func @transform_0(%arg0: i32) -> (i32, i32) {
    %c0_i32 = arith.constant 0 : i32
    %c0_i32_0 = arith.constant 0 : i32
    return %arg0, %c0_i32 : i32, i32
  }
  func.func @transform_1(%arg0: i32) -> (i32, i32) {
    %c0_i32 = arith.constant 0 : i32
    %c0_i32_0 = arith.constant 0 : i32
    %c0_i32_1 = arith.constant 0 : i32
    return %c0_i32, %c0_i32_0 : i32, i32
  }
  func.func @transform_2(%arg0: i32) -> (i32, i32) {
    %c0_i32 = arith.constant 0 : i32
    %c0_i32_0 = arith.constant 0 : i32
    %c0_i32_1 = arith.constant 0 : i32
    return %c0_i32, %c0_i32_0 : i32, i32
  }
  func.func @transform_3(%arg0: i32) -> i32 {
    %c0_i32 = arith.constant 0 : i32
    %c0_i32_0 = arith.constant 0 : i32
    return %c0_i32 : i32
  }
  func.func @transform_4(%arg0: i32) -> (i32, i32) {
    %c0_i32 = arith.constant 0 : i32
    %c0_i32_0 = arith.constant 0 : i32
    return %arg0, %c0_i32 : i32, i32
  }
}

</mosaic_0001>

<llo_original>
// kernel: tpu_custom_call.1
$region0: #{tpu_custom_call.1}
  #allocation0 [shape = 'u32[]', space=smem, size = 0x4, offset = 0x4, fixed_abs, tag = 'smem constant byte address 0x4 - core index']
  #allocation1 [shape = 'u32[144,128]{1,0:T(1,128)}', space=vmem, size = 0x12000, scoped, tag = 'internal scratch']
  #allocation2 [shape = 'f32[1]{0:T(128)S(6)}', space=smem, size = 0x200, scoped, tag = 'scoped memory for tpu_custom_call.1']
  %s0 = inlined_call_operand.hbm [shape: f32[8,128], index: 0, kind: input, shape index: {}]
  %s1 = inlined_call_operand.hbm [shape: f32[128,128], index: 1, kind: input, shape index: {}]
  %s2 = inlined_call_operand.vmem [shape: f32[1,128], index: 2, kind: input, shape index: {}]
  %s3 = inlined_call_operand.<no memory space> [shape: f32[1], index: 3, kind: input, shape index: {}]
  %s4 = inlined_call_operand.hbm [shape: f32[8,128], index: 4, kind: output, shape index: {}]
  %s5 = sld [smem:[#allocation0]]
  $region34: #{tpu_custom_call.1} parent=0
    _
  %s7 = ssub.s32 1, %s5
  %s8 = scalar_select 0, %s7, %s5
  %9 = sst [smem:[#allocation2]] %s3
  $region1: #{tpu_custom_call.1} parent=0
    #allocation3 [shape = 'u8[4096]{0}', space=vmem, size = 0x1000, scoped, tag = 'input window, operand 0, single buffered']
    #allocation4 [shape = 's32[1]{0}', space=sflag, size = 0x4, scoped, tag = 'scoped memory for tpu_custom_call.1']
    #allocation5 [shape = 's32[1]{0}', space=sflag, size = 0x4, scoped, tag = 'scoped memory for tpu_custom_call.1']
    #allocation6 [shape = 'u8[65536]{0}', space=vmem, size = 0x10000, scoped, tag = 'input window, operand 1, single buffered']
    #allocation7 [shape = 's32[1]{0}', space=sflag, size = 0x4, scoped, tag = 'scoped memory for tpu_custom_call.1']
    #allocation8 [shape = 'u8[4096]{0}', space=vmem, size = 0x1000, scoped, tag = 'output window, operand 0, single buffered']
    %10 = vsyncpa [#allocation4], 0
    %11 = vsyncpa [#allocation7], 0
    %12 = vsyncpa [#allocation5], 0
    // Predicated region
    $region2: #{tpu_custom_call.1} parent=1 // pred_check
      _
    $region3: #{tpu_custom_call.1} parent=1 // pred_check_branch
      %14 = sbr.rel (0) target = $region5
    $region4: #{tpu_custom_call.1} parent=1 // pred_region
      %s16 = ssub.s32 128, 128
      %17 = vsyncadd [#allocation4], %s16
      %s19 = sshll.u32 [#allocation3], 4
      %s20 = int_to_ptr.vmem [resolvable:$true] %s19
      %22 = dma.hbm_to_vmem [thread:$0]  %s0, 128, %s20, [#allocation4]
    $region5: #{tpu_custom_call.1} parent=1 // pred_fallthru
      _
    // Predicated region
    $region6: #{tpu_custom_call.1} parent=1 // pred_check
      _
    $region7: #{tpu_custom_call.1} parent=1 // pred_check_branch
      %24 = sbr.rel (0) target = $region9
    $region8: #{tpu_custom_call.1} parent=1 // pred_region
      %s26 = ssub.s32 2048, 2048
      %27 = vsyncadd [#allocation7], %s26
      %s28 = sshll.u32 [#allocation6], 4
      %s29 = int_to_ptr.vmem [resolvable:$true] %s28
      %34 = dma.hbm_to_vmem [thread:$0]  %s1, 2048, %s29, [#allocation7], 128, 128, 8
    $region9: #{tpu_custom_call.1} parent=1 // pred_fallthru
      _
    // Predicated region
    $region10: #{tpu_custom_call.1} parent=1 // pred_check
      _
    $region11: #{tpu_custom_call.1} parent=1 // pred_check_branch
      %36 = sbr.rel (0) target = $region13
    $region12: #{tpu_custom_call.1} parent=1 // pred_region
      _
    $region13: #{tpu_custom_call.1} parent=1 // pred_fallthru
      _
    // Predicated region
    $region14: #{tpu_custom_call.1} parent=1 // pred_check
      _
    $region15: #{tpu_custom_call.1} parent=1 // pred_check_branch
      %38 = sbr.rel (0) target = $region17
    $region16: #{tpu_custom_call.1} parent=1 // pred_region
      _
    $region17: #{tpu_custom_call.1} parent=1 // pred_fallthru
      _
    // Predicated region
    $region18: #{tpu_custom_call.1} parent=1 // pred_check
      _
    $region19: #{tpu_custom_call.1} parent=1 // pred_check_branch
      %40 = sbr.rel (0) target = $region21
    $region20: #{tpu_custom_call.1} parent=1 // pred_region
      %41 = dma.done [#allocation4], 128
    $region21: #{tpu_custom_call.1} parent=1 // pred_fallthru
      _
    // Predicated region
    $region22: #{tpu_custom_call.1} parent=1 // pred_check
      _
    $region23: #{tpu_custom_call.1} parent=1 // pred_check_branch
      %43 = sbr.rel (0) target = $region25
    $region24: #{tpu_custom_call.1} parent=1 // pred_region
      %44 = dma.done [#allocation7], 2048
    $region25: #{tpu_custom_call.1} parent=1 // pred_fallthru
      _
    %v45 = vld [vmem:[#allocation3] sm:$0xff]
    %v46 = vld [vmem:[#allocation6] sm:$0xff]
    %v47 = vld [vmem:[#allocation6 + $0x8] sm:$0xff]
    %v48 = vld [vmem:[#allocation6 + $0x10] sm:$0xff]
    %v49 = vld [vmem:[#allocation6 + $0x18] sm:$0xff]
    %v50 = vld [vmem:[#allocation6 + $0x20] sm:$0xff]
    %v51 = vld [vmem:[#allocation6 + $0x28] sm:$0xff]
    %v52 = vld [vmem:[#allocation6 + $0x30] sm:$0xff]
    %v53 = vld [vmem:[#allocation6 + $0x38] sm:$0xff]
    %v54 = vld [vmem:[#allocation6 + $0x40] sm:$0xff]
    %v55 = vld [vmem:[#allocation6 + $0x48] sm:$0xff]
    %v56 = vld [vmem:[#allocation6 + $0x50] sm:$0xff]
    %v57 = vld [vmem:[#allocation6 + $0x58] sm:$0xff]
    %v58 = vld [vmem:[#allocation6 + $0x60] sm:$0xff]
    %v59 = vld [vmem:[#allocation6 + $0x68] sm:$0xff]
    %v60 = vld [vmem:[#allocation6 + $0x70] sm:$0xff]
    %v61 = vld [vmem:[#allocation6 + $0x78] sm:$0xff]
    %s62 = sld [smem:[#allocation2]]
    %v63 = vld [vmem:[%s2] sm:$0x1]
    %v65 = vlaneseq
    %v66 = vshrl.u32 %v65, 7
    %v67 = vsub.s32 0, %v66
    %v68 = vrot.slane %v63, %v67
    %70 = vmatprep.subr.mxu0 0.0
    %71 = vmatpush1.msra.mxu0 %v61
    %72 = vmatprep.subr.mxu0 0.0
    %73 = vmatpush1.msra.mxu0 %v60
    %74 = vmatprep.subr.mxu0 0.0
    %75 = vmatpush1.msra.mxu0 %v59
    %76 = vmatprep.subr.mxu0 0.0
    %77 = vmatpush1.msra.mxu0 %v58
    %78 = vmatprep.subr.mxu0 0.0
    %79 = vmatpush1.msra.mxu0 %v57
    %80 = vmatprep.subr.mxu0 0.0
    %81 = vmatpush1.msra.mxu0 %v56
    %82 = vmatprep.subr.mxu0 0.0
    %83 = vmatpush1.msra.mxu0 %v55
    %84 = vmatprep.subr.mxu0 0.0
    %85 = vmatpush1.msra.mxu0 %v54
    %86 = vmatprep.subr.mxu0 0.0
    %87 = vmatpush1.msra.mxu0 %v53
    %88 = vmatprep.subr.mxu0 0.0
    %89 = vmatpush1.msra.mxu0 %v52
    %90 = vmatprep.subr.mxu0 0.0
    %91 = vmatpush1.msra.mxu0 %v51
    %92 = vmatprep.subr.mxu0 0.0
    %93 = vmatpush1.msra.mxu0 %v50
    %94 = vmatprep.subr.mxu0 0.0
    %95 = vmatpush1.msra.mxu0 %v49
    %96 = vmatprep.subr.mxu0 0.0
    %97 = vmatpush1.msra.mxu0 %v48
    %98 = vmatprep.subr.mxu0 0.0
    %99 = vmatpush1.msra.mxu0 %v47
    %100 = vmatprep.subr.mxu0 0.0
    %101 = vmatpush1.msra.mxu0 %v46
    %102 = vmatprep.subr.mxu0 0.0
    %103 = vmatpush2.msra.mxu0 0.0
    %104 = vmatprep.subr.mxu0 0.0
    %105 = vmatpush2.msra.mxu0 0.0
    %106 = vmatprep.subr.mxu0 0.0
    %107 = vmatpush2.msra.mxu0 0.0
    %108 = vmatprep.subr.mxu0 0.0
    %109 = vmatpush2.msra.mxu0 0.0
    %110 = vmatprep.subr.mxu0 0.0
    %111 = vmatpush2.msra.mxu0 0.0
    %112 = vmatprep.subr.mxu0 0.0
    %113 = vmatpush2.msra.mxu0 0.0
    %114 = vmatprep.subr.mxu0 0.0
    %115 = vmatpush2.msra.mxu0 0.0
    %116 = vmatprep.subr.mxu0 0.0
    %117 = vmatpush2.msra.mxu0 0.0
    %118 = vmatprep.subr.mxu0 0.0
    %119 = vmatpush2.msra.mxu0 0.0
    %120 = vmatprep.subr.mxu0 0.0
    %121 = vmatpush2.msra.mxu0 0.0
    %122 = vmatprep.subr.mxu0 0.0
    %123 = vmatpush2.msra.mxu0 0.0
    %124 = vmatprep.subr.mxu0 0.0
    %125 = vmatpush2.msra.mxu0 0.0
    %126 = vmatprep.subr.mxu0 0.0
    %127 = vmatpush2.msra.mxu0 0.0
    %128 = vmatprep.subr.mxu0 0.0
    %129 = vmatpush2.msra.mxu0 0.0
    %130 = vmatprep.subr.mxu0 0.0
    %131 = vmatpush2.msra.mxu0 0.0
    %132 = vmatprep.subr.mxu0 0.0
    %133 = vmatpush2.msra.mxu0 0.0
    %134 = vmatprep.mubr.f32.mxu0 0.0
    %135 = vmatmul.mubr.f32.gmra.mxu0 %v45
    %v136 = vpop.f32.mrf.mxu0
    %v137 = vadd.f32 %v68, %v136
    %v138 = vpop.f32.mrf.mxu0
    %139 = vdwg.mxu0
    %v140 = vstv %s62
    %v141 = vmul.f32 %v140, %v45
    %v142 = vadd.f32 %v137, %v141
    %143 = vst [vmem:[#allocation8] sm:$0xff] %v142
    // Predicated region
    $region26: #{tpu_custom_call.1} parent=1 // pred_check
      _
    $region27: #{tpu_custom_call.1} parent=1 // pred_check_branch
      %145 = sbr.rel (0) target = $region29
    $region28: #{tpu_custom_call.1} parent=1 // pred_region
      %s147 = ssub.s32 128, 128
      %148 = vsyncadd [#allocation5], %s147
      %s150 = sshll.u32 [#allocation8], 4
      %s151 = int_to_ptr.vmem [resolvable:$true] %s150
      %153 = dma.vmem_to_hbm [thread:$0]  %s151, 128, %s4, [#allocation5]
    $region29: #{tpu_custom_call.1} parent=1 // pred_fallthru
      _
    // Predicated region
    $region30: #{tpu_custom_call.1} parent=1 // pred_check
      _
    $region31: #{tpu_custom_call.1} parent=1 // pred_check_branch
      %155 = sbr.rel (0) target = $region33
    $region32: #{tpu_custom_call.1} parent=1 // pred_region
      %156 = dma.done [#allocation5], 128
    $region33: #{tpu_custom_call.1} parent=1 // pred_fallthru
      _
    %157 = vsyncpa [#allocation4], 1
    %158 = vsyncpa [#allocation7], 1
    %159 = vsyncpa [#allocation5], 1

// kernel: tpu_custom_call.1
$region0: #{tpu_custom_call.1}
  #allocation0 [shape = 'u32[]', space=smem, size = 0x4, offset = 0x4, fixed_abs, tag = 'smem constant byte address 0x4 - core index']
  #allocation1 [shape = 'u32[144,128]{1,0:T(1,128)}', space=vmem, size = 0x12000, scoped, tag = 'internal scratch']
  #allocation2 [shape = 'f32[1]{0:T(128)S(6)}', space=smem, size = 0x200, scoped, tag = 'scoped memory for tpu_custom_call.1']
  %s0 = inlined_call_operand.hbm [shape: f32[8,128], index: 0, kind: input, shape index: {}]
  %s1 = inlined_call_operand.hbm [shape: f32[128,128], index: 1, kind: input, shape index: {}]
  %s2 = inlined_call_operand.vmem [shape: f32[1,128], index: 2, kind: input, shape index: {}]
  %s3 = inlined_call_operand.<no memory space> [shape: f32[1], index: 3, kind: input, shape index: {}]
  %s4 = inlined_call_operand.hbm [shape: f32[8,128], index: 4, kind: output, shape index: {}]
  %s5 = sld [smem:[#allocation0]]
  $region34: #{tpu_custom_call.1} parent=0
    _
  %s7 = ssub.s32 1, %s5
  %s8 = scalar_select 0, %s7, %s5
  %9 = sst [smem:[#allocation2]] %s3
  $region1: #{tpu_custom_call.1} parent=0
    #allocation3 [shape = 'u8[4096]{0}', space=vmem, size = 0x1000, scoped, tag = 'input window, operand 0, single buffered']
    #allocation4 [shape = 's32[1]{0}', space=sflag, size = 0x4, scoped, tag = 'scoped memory for tpu_custom_call.1']
    #allocation5 [shape = 's32[1]{0}', space=sflag, size = 0x4, scoped, tag = 'scoped memory for tpu_custom_call.1']
    #allocation6 [shape = 'u8[65536]{0}', space=vmem, size = 0x10000, scoped, tag = 'input window, operand 1, single buffered']
    #allocation7 [shape = 's32[1]{0}', space=sflag, size = 0x4, scoped, tag = 'scoped memory for tpu_custom_call.1']
    #allocation8 [shape = 'u8[4096]{0}', space=vmem, size = 0x1000, scoped, tag = 'output window, operand 0, single buffered']
    %10 = vsyncpa [#allocation4], 0
    %11 = vsyncpa [#allocation7], 0
    %12 = vsyncpa [#allocation5], 0
    // Predicated region
    $region2: #{tpu_custom_call.1} parent=1 // pred_check
      _
    $region3: #{tpu_custom_call.1} parent=1 // pred_check_branch
      %14 = sbr.rel (0) target = $region5
    $region4: #{tpu_custom_call.1} parent=1 // pred_region
      %s16 = ssub.s32 128, 128
      %17 = vsyncadd [#allocation4], %s16
      %s19 = sshll.u32 [#allocation3], 4
      %s20 = int_to_ptr.vmem [resolvable:$true] %s19
      %22 = dma.hbm_to_vmem [thread:$0]  %s0, 128, %s20, [#allocation4]
    $region5: #{tpu_custom_call.1} parent=1 // pred_fallthru
      _
    // Predicated region
    $region6: #{tpu_custom_call.1} parent=1 // pred_check
      _
    $region7: #{tpu_custom_call.1} parent=1 // pred_check_branch
      %24 = sbr.rel (0) target = $region9
    $region8: #{tpu_custom_call.1} parent=1 // pred_region
      %s26 = ssub.s32 2048, 2048
      %27 = vsyncadd [#allocation7], %s26
      %s28 = sshll.u32 [#allocation6], 4
      %s29 = int_to_ptr.vmem [resolvable:$true] %s28
      %34 = dma.hbm_to_vmem [thread:$0]  %s1, 2048, %s29, [#allocation7], 128, 128, 8
    $region9: #{tpu_custom_call.1} parent=1 // pred_fallthru
      _
    // Predicated region
    $region10: #{tpu_custom_call.1} parent=1 // pred_check
      _
    $region11: #{tpu_custom_call.1} parent=1 // pred_check_branch
      %36 = sbr.rel (0) target = $region13
    $region12: #{tpu_custom_call.1} parent=1 // pred_region
      _
    $region13: #{tpu_custom_call.1} parent=1 // pred_fallthru
      _
    // Predicated region
    $region14: #{tpu_custom_call.1} parent=1 // pred_check
      _
    $region15: #{tpu_custom_call.1} parent=1 // pred_check_branch
      %38 = sbr.rel (0) target = $region17
    $region16: #{tpu_custom_call.1} parent=1 // pred_region
      _
    $region17: #{tpu_custom_call.1} parent=1 // pred_fallthru
      _
    // Predicated region
    $region18: #{tpu_custom_call.1} parent=1 // pred_check
      _
    $region19: #{tpu_custom_call.1} parent=1 // pred_check_branch
      %40 = sbr.rel (0) target = $region21
    $region20: #{tpu_custom_call.1} parent=1 // pred_region
      %41 = dma.done [#allocation4], 128
    $region21: #{tpu_custom_call.1} parent=1 // pred_fallthru
      _
    // Predicated region
    $region22: #{tpu_custom_call.1} parent=1 // pred_check
      _
    $region23: #{tpu_custom_call.1} parent=1 // pred_check_branch
      %43 = sbr.rel (0) target = $region25
    $region24: #{tpu_custom_call.1} parent=1 // pred_region
      %44 = dma.done [#allocation7], 2048
    $region25: #{tpu_custom_call.1} parent=1 // pred_fallthru
      _
    %v45 = vld [vmem:[#allocation3] sm:$0xff]
    %v46 = vld [vmem:[#allocation6] sm:$0xff]
    %v47 = vld [vmem:[#allocation6 + $0x8] sm:$0xff]
    %v48 = vld [vmem:[#allocation6 + $0x10] sm:$0xff]
    %v49 = vld [vmem:[#allocation6 + $0x18] sm:$0xff]
    %v50 = vld [vmem:[#allocation6 + $0x20] sm:$0xff]
    %v51 = vld [vmem:[#allocation6 + $0x28] sm:$0xff]
    %v52 = vld [vmem:[#allocation6 + $0x30] sm:$0xff]
    %v53 = vld [vmem:[#allocation6 + $0x38] sm:$0xff]
    %v54 = vld [vmem:[#allocation6 + $0x40] sm:$0xff]
    %v55 = vld [vmem:[#allocation6 + $0x48] sm:$0xff]
    %v56 = vld [vmem:[#allocation6 + $0x50] sm:$0xff]
    %v57 = vld [vmem:[#allocation6 + $0x58] sm:$0xff]
    %v58 = vld [vmem:[#allocation6 + $0x60] sm:$0xff]
    %v59 = vld [vmem:[#allocation6 + $0x68] sm:$0xff]
    %v60 = vld [vmem:[#allocation6 + $0x70] sm:$0xff]
    %v61 = vld [vmem:[#allocation6 + $0x78] sm:$0xff]
    %s62 = sld [smem:[#allocation2]]
    %v63 = vld [vmem:[%s2] sm:$0x1]
    %v65 = vlaneseq
    %v66 = vshrl.u32 %v65, 7
    %v67 = vsub.s32 0, %v66
    %v68 = vrot.slane %v63, %v67
    %70 = vmatprep.subr.mxu0 0.0
    %71 = vmatpush1.msra.mxu0 %v61
    %72 = vmatprep.subr.mxu0 0.0
    %73 = vmatpush1.msra.mxu0 %v60
    %74 = vmatprep.subr.mxu0 0.0
    %75 = vmatpush1.msra.mxu0 %v59
    %76 = vmatprep.subr.mxu0 0.0
    %77 = vmatpush1.msra.mxu0 %v58
    %78 = vmatprep.subr.mxu0 0.0
    %79 = vmatpush1.msra.mxu0 %v57
    %80 = vmatprep.subr.mxu0 0.0
    %81 = vmatpush1.msra.mxu0 %v56
    %82 = vmatprep.subr.mxu0 0.0
    %83 = vmatpush1.msra.mxu0 %v55
    %84 = vmatprep.subr.mxu0 0.0
    %85 = vmatpush1.msra.mxu0 %v54
    %86 = vmatprep.subr.mxu0 0.0
    %87 = vmatpush1.msra.mxu0 %v53
    %88 = vmatprep.subr.mxu0 0.0
    %89 = vmatpush1.msra.mxu0 %v52
    %90 = vmatprep.subr.mxu0 0.0
    %91 = vmatpush1.msra.mxu0 %v51
    %92 = vmatprep.subr.mxu0 0.0
    %93 = vmatpush1.msra.mxu0 %v50
    %94 = vmatprep.subr.mxu0 0.0
    %95 = vmatpush1.msra.mxu0 %v49
    %96 = vmatprep.subr.mxu0 0.0
    %97 = vmatpush1.msra.mxu0 %v48
    %98 = vmatprep.subr.mxu0 0.0
    %99 = vmatpush1.msra.mxu0 %v47
    %100 = vmatprep.subr.mxu0 0.0
    %101 = vmatpush1.msra.mxu0 %v46
    %102 = vmatprep.subr.mxu0 0.0
    %103 = vmatpush2.msra.mxu0 0.0
    %104 = vmatprep.subr.mxu0 0.0
    %105 = vmatpush2.msra.mxu0 0.0
    %106 = vmatprep.subr.mxu0 0.0
    %107 = vmatpush2.msra.mxu0 0.0
    %108 = vmatprep.subr.mxu0 0.0
    %109 = vmatpush2.msra.mxu0 0.0
    %110 = vmatprep.subr.mxu0 0.0
    %111 = vmatpush2.msra.mxu0 0.0
    %112 = vmatprep.subr.mxu0 0.0
    %113 = vmatpush2.msra.mxu0 0.0
    %114 = vmatprep.subr.mxu0 0.0
    %115 = vmatpush2.msra.mxu0 0.0
    %116 = vmatprep.subr.mxu0 0.0
    %117 = vmatpush2.msra.mxu0 0.0
    %118 = vmatprep.subr.mxu0 0.0
    %119 = vmatpush2.msra.mxu0 0.0
    %120 = vmatprep.subr.mxu0 0.0
    %121 = vmatpush2.msra.mxu0 0.0
    %122 = vmatprep.subr.mxu0 0.0
    %123 = vmatpush2.msra.mxu0 0.0
    %124 = vmatprep.subr.mxu0 0.0
    %125 = vmatpush2.msra.mxu0 0.0
    %126 = vmatprep.subr.mxu0 0.0
    %127 = vmatpush2.msra.mxu0 0.0
    %128 = vmatprep.subr.mxu0 0.0
    %129 = vmatpush2.msra.mxu0 0.0
    %130 = vmatprep.subr.mxu0 0.0
    %131 = vmatpush2.msra.mxu0 0.0
    %132 = vmatprep.subr.mxu0 0.0
    %133 = vmatpush2.msra.mxu0 0.0
    %134 = vmatprep.mubr.f32.mxu0 0.0
    %135 = vmatmul.mubr.f32.gmra.mxu0 %v45
    %v136 = vpop.f32.mrf.mxu0
    %v137 = vadd.f32 %v68, %v136
    %v138 = vpop.f32.mrf.mxu0
    %139 = vdwg.mxu0
    %v140 = vstv %s62
    %v141 = vmul.f32 %v140, %v45
    %v142 = vadd.f32 %v137, %v141
    %143 = vst [vmem:[#allocation8] sm:$0xff] %v142
    // Predicated region
    $region26: #{tpu_custom_call.1} parent=1 // pred_check
      _
    $region27: #{tpu_custom_call.1} parent=1 // pred_check_branch
      %145 = sbr.rel (0) target = $region29
    $region28: #{tpu_custom_call.1} parent=1 // pred_region
      %s147 = ssub.s32 128, 128
      %148 = vsyncadd [#allocation5], %s147
      %s150 = sshll.u32 [#allocation8], 4
      %s151 = int_to_ptr.vmem [resolvable:$true] %s150
      %153 = dma.vmem_to_hbm [thread:$0]  %s151, 128, %s4, [#allocation5]
    $region29: #{tpu_custom_call.1} parent=1 // pred_fallthru
      _
    // Predicated region
    $region30: #{tpu_custom_call.1} parent=1 // pred_check
      _
    $region31: #{tpu_custom_call.1} parent=1 // pred_check_branch
      %155 = sbr.rel (0) target = $region33
    $region32: #{tpu_custom_call.1} parent=1 // pred_region
      %156 = dma.done [#allocation5], 128
    $region33: #{tpu_custom_call.1} parent=1 // pred_fallthru
      _
    %157 = vsyncpa [#allocation4], 1
    %158 = vsyncpa [#allocation7], 1
    %159 = vsyncpa [#allocation5], 1

</llo_original>
